<compile_context>
chip_gen: v5e
topology: v5e:2x2
jax: 0.10.0
libtpu: 0.0.40
codegen_flags: <defaults>
</compile_context>

<pallas_src>
import functools

import jax
import jax.numpy as jnp
from jax.experimental import pallas as pl
from jax.experimental.pallas import tpu as pltpu


def _round_up(n: int, m: int) -> int:
    return (n + m - 1) // m * m


def encoder_kernel(x_ref, w1_ref, b1_ref, w2_ref, b2_ref, y_ref, *, compute_dtype):
    # In-kernel cast of x (VPU, not the bound slot) avoids an extra wrapper-side
    # HBM pass over x.
    x = x_ref[...].astype(compute_dtype)

    # Layer 1: MXU matmul with f32 accumulation; bias add + ReLU in f32 (VPU).
    h = jnp.dot(x, w1_ref[...], preferred_element_type=jnp.float32) + b1_ref[...]
    h = jnp.maximum(h, 0.0)

    # Layer 2: hidden activation is cast to the MXU input dtype.  In the bf16
    # path this trades a little accuracy for bandwidth/throughput; accumulation
    # stays f32.  (Pass compute_dtype=jnp.float32 for a bit-faithful encoder.)
    h = h.astype(compute_dtype)
    y = jnp.dot(h, w2_ref[...], preferred_element_type=jnp.float32) + b2_ref[...]
    y_ref[...] = y.astype(y_ref.dtype)


def _choose_batch_tile(B: int, block_b: int) -> int:
    """Batch tile: >= 2 grid steps when the batch allows it (v7x megacore),
    nearly-full last tile (no large batch-pad waste), 16-row alignment for bf16
    sublane packing (falls back to 8-row / full-batch for tiny batches)."""
    n_steps = max(2, pl.cdiv(B, block_b))
    tb = _round_up(pl.cdiv(B, n_steps), 16)
    if tb >= B:
        tb8 = _round_up(pl.cdiv(B, n_steps), 8)   # try f32-sublane alignment
        tb = tb8 if tb8 < B else B                # else one full-batch block
    return tb


def _vmem_limit_bytes() -> int:
    try:
        cap = int(pltpu.get_tpu_info().vmem_capacity_bytes)
    except Exception:
        cap = 64 * 2**20          # conservative default (v7x per-TC VMEM)
    return max(32 * 2**20, cap - 16 * 2**20)


def extract_encoder_forward(x, w1, b1, w2, b2, *, block_b=1024,
                            compute_dtype=jnp.bfloat16):
    """Encoder forward pass: relu(x @ w1 + b1) @ w2 + b2.

    x : (B, D_in)
    w1: (D_in, H),  b1: (1, H)
    w2: (H, L),     b2: (1, L)
    compute_dtype: dtype fed to the MXU for x/W1/h/W2 (default bf16).
                   Accumulation, bias add and ReLU are always f32.
    """
    B, D_in = x.shape
    H = w1.shape[1]
    L = w2.shape[1]
    assert w1.shape == (D_in, H) and b1.shape == (1, H)
    assert w2.shape == (H, L) and b2.shape == (1, L)

    out_dtype = x.dtype
    cd = jnp.dtype(compute_dtype)

    # Only the (tiny, one-time) weights/biases are cast in the wrapper; x is
    # cast inside the kernel so it is read from HBM exactly once.
    w1c = w1.astype(cd)
    w2c = w2.astype(cd)
    b1c = b1.astype(jnp.float32)
    b2c = b2.astype(jnp.float32)

    tb = _choose_batch_tile(B, block_b)
    grid = (pl.cdiv(B, tb),)

    # NOTE: for very large encoders where (D_in*H + H*L) in compute_dtype no
    # longer fits comfortably in VMEM (roughly > 20-24 MiB on v7x), the right
    # structure is an extra "arbitrary" reduction grid axis over D_in with an
    # f32 accumulator scratch, streaming W1 k-slabs.  Not needed at these sizes.

    cost = pl.CostEstimate(
        flops=2 * B * D_in * H + 2 * B * H * L,
        transcendentals=0,
        bytes_accessed=(x.size * x.dtype.itemsize
                        + (w1c.size + w2c.size) * cd.itemsize
                        + (b1c.size + b2c.size) * 4
                        + B * L * jnp.dtype(out_dtype).itemsize),
    )

    kernel = functools.partial(encoder_kernel, compute_dtype=cd)
    out_shape = jax.ShapeDtypeStruct((B, L), out_dtype)
    compiler_params = pltpu.CompilerParams(
        dimension_semantics=("parallel",),
        vmem_limit_bytes=_vmem_limit_bytes(),
    )

    def build(single_buffer_weights):
        wkw = ({"pipeline_mode": pl.Buffered(buffer_count=1)}
               if single_buffer_weights else {})
        in_specs = [
            # x tile: streamed (double-buffered) over the batch grid axis.
            # Feature dim equals the full array extent -> no padding needed.
            pl.BlockSpec((tb, D_in), lambda i: (i, 0)),
            # Weights & biases: constant index_map -> fetched once, VMEM-resident
            # (single-buffered when supported).
            pl.BlockSpec((D_in, H), lambda i: (0, 0), **wkw),
            pl.BlockSpec((1, H), lambda i: (0, 0), **wkw),
            pl.BlockSpec((H, L), lambda i: (0, 0), **wkw),
            pl.BlockSpec((1, L), lambda i: (0, 0), **wkw),
        ]
        out_specs = pl.BlockSpec((tb, L), lambda i: (i, 0))
        return pl.pallas_call(
            kernel,
            out_shape=out_shape,
            grid=grid,
            in_specs=in_specs,
            out_specs=out_specs,
            compiler_params=compiler_params,
            cost_estimate=cost,
        )

    try:
        return build(True)(x, w1c, b1c, w2c, b2c)
    except Exception:
        # Fallback for JAX builds where pipeline_mode=pl.Buffered(1) is not
        # supported on pallas_call BlockSpecs (weights become double-buffered).
        return build(False)(x, w1c, b1c, w2c, b2c)


def reference_forward(x, w1, b1, w2, b2):
    h = jnp.maximum(x @ w1 + b1, 0.0)
    return h @ w2 + b2


if __name__ == "__main__":
    # Small shapes consistent with an MLP encoder:
    # batch=8, input_size=32, hidden=64, latent=16.
    B, D_in, H, L = 8, 32, 64, 16

    key = jax.random.PRNGKey(0)
    k_x, k_w1, k_b1, k_w2, k_b2, k_x2 = jax.random.split(key, 6)

    x = jax.random.normal(k_x, (B, D_in), dtype=jnp.float32)
    # torch.nn.Linear-style uniform init, scaled by 1/sqrt(fan_in).
    w1 = jax.random.uniform(k_w1, (D_in, H), jnp.float32, -1.0, 1.0) / jnp.sqrt(1.0 * D_in)
    b1 = jax.random.uniform(k_b1, (1, H), jnp.float32, -1.0, 1.0) / jnp.sqrt(1.0 * D_in)
    w2 = jax.random.uniform(k_w2, (H, L), jnp.float32, -1.0, 1.0) / jnp.sqrt(1.0 * H)
    b2 = jax.random.uniform(k_b2, (1, L), jnp.float32, -1.0, 1.0) / jnp.sqrt(1.0 * H)

    y_ref = reference_forward(x, w1, b1, w2, b2)

    # f32 compute path (matches the f32 PyTorch encoder; strict tolerance).
    y_f32 = jax.block_until_ready(
        extract_encoder_forward(x, w1, b1, w2, b2, compute_dtype=jnp.float32))
    assert y_f32.shape == (B, L)
    assert jnp.allclose(y_f32, y_ref, atol=1e-5, rtol=1e-5)

    # Default bf16 MXU path (f32 accumulation); loose tolerance for the narrow dtype.
    y_bf16 = jax.block_until_ready(extract_encoder_forward(x, w1, b1, w2, b2))
    assert y_bf16.shape == (B, L)
    assert jnp.allclose(y_bf16, y_ref, atol=5e-2, rtol=5e-2)

    # Batch that does not divide the tile: exercises the >=2-step grid and the
    # partial edge block (no explicit batch padding, no output slice).
    B2 = 200
    x2 = jax.random.normal(k_x2, (B2, D_in), dtype=jnp.float32)
    y2 = jax.block_until_ready(
        extract_encoder_forward(x2, w1, b1, w2, b2, compute_dtype=jnp.float32))
    assert y2.shape == (B2, L)
    assert jnp.allclose(y2, reference_forward(x2, w1, b1, w2, b2), atol=1e-5, rtol=1e-5)

    # TODO(synk): ExtractEncoder's checkpoint loading (torch.load of a pickled
    # state dict) has no Pallas equivalent; parameters are synthesized in-script.
    print("KERNEL_OK")
</pallas_src>

<mosaic_0001>
module attributes {stable_mosaic.version = 11 : i64} {
  func.func @encoder_kernel(%arg0: i32, %arg1: memref<8x32xf32, #tpu.memory_space<vmem>>, %arg2: memref<32x64xf32, #tpu.memory_space<vmem>>, %arg3: memref<1x64xf32, #tpu.memory_space<vmem>>, %arg4: memref<64x16xf32, #tpu.memory_space<vmem>>, %arg5: memref<1x16xf32, #tpu.memory_space<vmem>>, %arg6: memref<8x16xf32, #tpu.memory_space<vmem>>) attributes {dimension_semantics = [#tpu.dimension_semantics<parallel>], iteration_bounds = array<i64: 1>, scalar_prefetch = 0 : i64, scratch_operands = 0 : i64, tpu.core_type = #tpu.core_type<tc>, window_params = [{transform_indices = @transform_0, window_bounds = array<i64: 8, 32>}, {pipeline_mode = #tpu.pipeline_mode<synchronous>, transform_indices = @transform_1, window_bounds = array<i64: 32, 64>}, {pipeline_mode = #tpu.pipeline_mode<synchronous>, transform_indices = @transform_2, window_bounds = array<i64: 1, 64>}, {pipeline_mode = #tpu.pipeline_mode<synchronous>, transform_indices = @transform_3, window_bounds = array<i64: 64, 16>}, {pipeline_mode = #tpu.pipeline_mode<synchronous>, transform_indices = @transform_4, window_bounds = array<i64: 1, 16>}, {transform_indices = @transform_5, window_bounds = array<i64: 8, 16>}]} {
    %c0 = arith.constant 0 : index
    %c0_0 = arith.constant 0 : index
    %0 = vector.load %arg1[%c0, %c0_0] : memref<8x32xf32, #tpu.memory_space<vmem>>, vector<8x32xf32>
    %c0_1 = arith.constant 0 : index
    %c0_2 = arith.constant 0 : index
    %1 = vector.load %arg2[%c0_1, %c0_2] : memref<32x64xf32, #tpu.memory_space<vmem>>, vector<32x64xf32>
    %cst = arith.constant dense<0.000000e+00> : vector<8x64xf32>
    %2 = tpu.matmul %0, %1, %cst {dimension_numbers = #tpu.dot_dimension_numbers<[1], [0], [0], [1], [0, 0, 1, 1], [], []>} : vector<8x32xf32>, vector<32x64xf32>, vector<8x64xf32> -> vector<8x64xf32>
    %c0_3 = arith.constant 0 : index
    %c0_4 = arith.constant 0 : index
    %3 = vector.load %arg3[%c0_3, %c0_4] : memref<1x64xf32, #tpu.memory_space<vmem>>, vector<1x64xf32>
    %4 = vector.broadcast %3 : vector<1x64xf32> to vector<8x64xf32>
    %5 = arith.addf %2, %4 : vector<8x64xf32>
    %cst_5 = arith.constant 0.000000e+00 : f32
    %6 = vector.broadcast %cst_5 : f32 to vector<8x64xf32>
    %7 = arith.maximumf %5, %6 : vector<8x64xf32>
    %c0_6 = arith.constant 0 : index
    %c0_7 = arith.constant 0 : index
    %8 = vector.load %arg4[%c0_6, %c0_7] : memref<64x16xf32, #tpu.memory_space<vmem>>, vector<64x16xf32>
    %cst_8 = arith.constant dense<0.000000e+00> : vector<8x16xf32>
    %9 = tpu.matmul %7, %8, %cst_8 {dimension_numbers = #tpu.dot_dimension_numbers<[1], [0], [0], [1], [0, 0, 1, 1], [], []>} : vector<8x64xf32>, vector<64x16xf32>, vector<8x16xf32> -> vector<8x16xf32>
    %c0_9 = arith.constant 0 : index
    %c0_10 = arith.constant 0 : index
    %10 = vector.load %arg5[%c0_9, %c0_10] : memref<1x16xf32, #tpu.memory_space<vmem>>, vector<1x16xf32>
    %11 = vector.broadcast %10 : vector<1x16xf32> to vector<8x16xf32>
    %12 = arith.addf %9, %11 : vector<8x16xf32>
    %c0_11 = arith.constant 0 : index
    %c0_12 = arith.constant 0 : index
    %13 = vector.load %arg6[%c0_11, %c0_12] : memref<8x16xf32, #tpu.memory_space<vmem>>, vector<8x16xf32>
    tpu.vector_store %arg6[%c0_11, %c0_12], %12 {strides = array<i32>} : memref<8x16xf32, #tpu.memory_space<vmem>>, vector<8x16xf32>,
    return
  }
  func.func @transform_0(%arg0: i32) -> (i32, i32) {
    %c0_i32 = arith.constant 0 : i32
    %c0_i32_0 = arith.constant 0 : i32
    return %arg0, %c0_i32 : i32, i32
  }
  func.func @transform_1(%arg0: i32) -> (i32, i32) {
    %c0_i32 = arith.constant 0 : i32
    %c0_i32_0 = arith.constant 0 : i32
    %c0_i32_1 = arith.constant 0 : i32
    return %c0_i32, %c0_i32_0 : i32, i32
  }
  func.func @transform_2(%arg0: i32) -> (i32, i32) {
    %c0_i32 = arith.constant 0 : i32
    %c0_i32_0 = arith.constant 0 : i32
    %c0_i32_1 = arith.constant 0 : i32
    return %c0_i32, %c0_i32_0 : i32, i32
  }
  func.func @transform_3(%arg0: i32) -> (i32, i32) {
    %c0_i32 = arith.constant 0 : i32
    %c0_i32_0 = arith.constant 0 : i32
    %c0_i32_1 = arith.constant 0 : i32
    return %c0_i32, %c0_i32_0 : i32, i32
  }
  func.func @transform_4(%arg0: i32) -> (i32, i32) {
    %c0_i32 = arith.constant 0 : i32
    %c0_i32_0 = arith.constant 0 : i32
    %c0_i32_1 = arith.constant 0 : i32
    return %c0_i32, %c0_i32_0 : i32, i32
  }
  func.func @transform_5(%arg0: i32) -> (i32, i32) {
    %c0_i32 = arith.constant 0 : i32
    %c0_i32_0 = arith.constant 0 : i32
    return %arg0, %c0_i32 : i32, i32
  }
}

module attributes {stable_mosaic.version = 11 : i64} {
  func.func @encoder_kernel(%arg0: i32, %arg1: memref<8x32xf32, #tpu.memory_space<vmem>>, %arg2: memref<32x64xf32, #tpu.memory_space<vmem>>, %arg3: memref<1x64xf32, #tpu.memory_space<vmem>>, %arg4: memref<64x16xf32, #tpu.memory_space<vmem>>, %arg5: memref<1x16xf32, #tpu.memory_space<vmem>>, %arg6: memref<8x16xf32, #tpu.memory_space<vmem>>) attributes {dimension_semantics = [#tpu.dimension_semantics<parallel>], iteration_bounds = array<i64: 1>, scalar_prefetch = 0 : i64, scratch_operands = 0 : i64, tpu.core_type = #tpu.core_type<tc>, window_params = [{transform_indices = @transform_0, window_bounds = array<i64: 8, 32>}, {pipeline_mode = #tpu.pipeline_mode<synchronous>, transform_indices = @transform_1, window_bounds = array<i64: 32, 64>}, {pipeline_mode = #tpu.pipeline_mode<synchronous>, transform_indices = @transform_2, window_bounds = array<i64: 1, 64>}, {pipeline_mode = #tpu.pipeline_mode<synchronous>, transform_indices = @transform_3, window_bounds = array<i64: 64, 16>}, {pipeline_mode = #tpu.pipeline_mode<synchronous>, transform_indices = @transform_4, window_bounds = array<i64: 1, 16>}, {transform_indices = @transform_5, window_bounds = array<i64: 8, 16>}]} {
    %c0 = arith.constant 0 : index
    %c0_0 = arith.constant 0 : index
    %0 = vector.load %arg1[%c0, %c0_0] : memref<8x32xf32, #tpu.memory_space<vmem>>, vector<8x32xf32>
    %c0_1 = arith.constant 0 : index
    %c0_2 = arith.constant 0 : index
    %1 = vector.load %arg2[%c0_1, %c0_2] : memref<32x64xf32, #tpu.memory_space<vmem>>, vector<32x64xf32>
    %cst = arith.constant dense<0.000000e+00> : vector<8x64xf32>
    %2 = tpu.matmul %0, %1, %cst {dimension_numbers = #tpu.dot_dimension_numbers<[1], [0], [0], [1], [0, 0, 1, 1], [], []>} : vector<8x32xf32>, vector<32x64xf32>, vector<8x64xf32> -> vector<8x64xf32>
    %c0_3 = arith.constant 0 : index
    %c0_4 = arith.constant 0 : index
    %3 = vector.load %arg3[%c0_3, %c0_4] : memref<1x64xf32, #tpu.memory_space<vmem>>, vector<1x64xf32>
    %4 = vector.broadcast %3 : vector<1x64xf32> to vector<8x64xf32>
    %5 = arith.addf %2, %4 : vector<8x64xf32>
    %cst_5 = arith.constant 0.000000e+00 : f32
    %6 = vector.broadcast %cst_5 : f32 to vector<8x64xf32>
    %7 = arith.maximumf %5, %6 : vector<8x64xf32>
    %c0_6 = arith.constant 0 : index
    %c0_7 = arith.constant 0 : index
    %8 = vector.load %arg4[%c0_6, %c0_7] : memref<64x16xf32, #tpu.memory_space<vmem>>, vector<64x16xf32>
    %cst_8 = arith.constant dense<0.000000e+00> : vector<8x16xf32>
    %9 = tpu.matmul %7, %8, %cst_8 {dimension_numbers = #tpu.dot_dimension_numbers<[1], [0], [0], [1], [0, 0, 1, 1], [], []>} : vector<8x64xf32>, vector<64x16xf32>, vector<8x16xf32> -> vector<8x16xf32>
    %c0_9 = arith.constant 0 : index
    %c0_10 = arith.constant 0 : index
    %10 = vector.load %arg5[%c0_9, %c0_10] : memref<1x16xf32, #tpu.memory_space<vmem>>, vector<1x16xf32>
    %11 = vector.broadcast %10 : vector<1x16xf32> to vector<8x16xf32>
    %12 = arith.addf %9, %11 : vector<8x16xf32>
    %c0_11 = arith.constant 0 : index
    %c0_12 = arith.constant 0 : index
    %13 = vector.load %arg6[%c0_11, %c0_12] : memref<8x16xf32, #tpu.memory_space<vmem>>, vector<8x16xf32>
    tpu.vector_store %arg6[%c0_11, %c0_12], %12 {strides = array<i32>} : memref<8x16xf32, #tpu.memory_space<vmem>>, vector<8x16xf32>,
    return
  }
  func.func @transform_0(%arg0: i32) -> (i32, i32) {
    %c0_i32 = arith.constant 0 : i32
    %c0_i32_0 = arith.constant 0 : i32
    return %arg0, %c0_i32 : i32, i32
  }
  func.func @transform_1(%arg0: i32) -> (i32, i32) {
    %c0_i32 = arith.constant 0 : i32
    %c0_i32_0 = arith.constant 0 : i32
    %c0_i32_1 = arith.constant 0 : i32
    return %c0_i32, %c0_i32_0 : i32, i32
  }
  func.func @transform_2(%arg0: i32) -> (i32, i32) {
    %c0_i32 = arith.constant 0 : i32
    %c0_i32_0 = arith.constant 0 : i32
    %c0_i32_1 = arith.constant 0 : i32
    return %c0_i32, %c0_i32_0 : i32, i32
  }
  func.func @transform_3(%arg0: i32) -> (i32, i32) {
    %c0_i32 = arith.constant 0 : i32
    %c0_i32_0 = arith.constant 0 : i32
    %c0_i32_1 = arith.constant 0 : i32
    return %c0_i32, %c0_i32_0 : i32, i32
  }
  func.func @transform_4(%arg0: i32) -> (i32, i32) {
    %c0_i32 = arith.constant 0 : i32
    %c0_i32_0 = arith.constant 0 : i32
    %c0_i32_1 = arith.constant 0 : i32
    return %c0_i32, %c0_i32_0 : i32, i32
  }
  func.func @transform_5(%arg0: i32) -> (i32, i32) {
    %c0_i32 = arith.constant 0 : i32
    %c0_i32_0 = arith.constant 0 : i32
    return %arg0, %c0_i32 : i32, i32
  }
}

</mosaic_0001>

<llo_original>
// kernel: tpu_custom_call.1
$region0: #{tpu_custom_call.1}
  #allocation0 [shape = 'u32[]', space=smem, size = 0x4, offset = 0x4, fixed_abs, tag = 'smem constant byte address 0x4 - core index']
  #allocation1 [shape = 'u32[72,128]{1,0:T(1,128)}', space=vmem, size = 0x9000, scoped, tag = 'internal scratch']
  %s0 = inlined_call_operand.vmem [shape: f32[8,32], index: 0, kind: input, shape index: {}]
  %s1 = inlined_call_operand.vmem [shape: f32[32,64], index: 1, kind: input, shape index: {}]
  %s2 = inlined_call_operand.vmem [shape: f32[1,64], index: 2, kind: input, shape index: {}]
  %s3 = inlined_call_operand.vmem [shape: f32[64,16], index: 3, kind: input, shape index: {}]
  %s4 = inlined_call_operand.vmem [shape: f32[1,16], index: 4, kind: input, shape index: {}]
  %s5 = inlined_call_operand.hbm [shape: f32[8,16], index: 5, kind: output, shape index: {}]
  %s6 = sld [smem:[#allocation0]]
  $region30: #{tpu_custom_call.1} parent=0
    _
  %s8 = ssub.s32 1, %s6
  %s9 = scalar_select 0, %s8, %s6
  $region1: #{tpu_custom_call.1} parent=0
    #allocation2 [shape = 'u8[4096]{0}', space=vmem, size = 0x1000, scoped, tag = 'output window, operand 0, single buffered']
    #allocation3 [shape = 's32[1]{0}', space=sflag, size = 0x4, scoped, tag = 'scoped memory for tpu_custom_call.1']
    %10 = vsyncpa [#allocation3], 0
    // Predicated region
    $region2: #{tpu_custom_call.1} parent=1 // pred_check
      _
    $region3: #{tpu_custom_call.1} parent=1 // pred_check_branch
      %12 = sbr.rel (0) target = $region5
    $region4: #{tpu_custom_call.1} parent=1 // pred_region
      _
    $region5: #{tpu_custom_call.1} parent=1 // pred_fallthru
      _
    // Predicated region
    $region6: #{tpu_custom_call.1} parent=1 // pred_check
      _
    $region7: #{tpu_custom_call.1} parent=1 // pred_check_branch
      %14 = sbr.rel (0) target = $region9
    $region8: #{tpu_custom_call.1} parent=1 // pred_region
      _
    $region9: #{tpu_custom_call.1} parent=1 // pred_fallthru
      _
    // Predicated region
    $region10: #{tpu_custom_call.1} parent=1 // pred_check
      _
    $region11: #{tpu_custom_call.1} parent=1 // pred_check_branch
      %16 = sbr.rel (0) target = $region13
    $region12: #{tpu_custom_call.1} parent=1 // pred_region
      _
    $region13: #{tpu_custom_call.1} parent=1 // pred_fallthru
      _
    // Predicated region
    $region14: #{tpu_custom_call.1} parent=1 // pred_check
      _
    $region15: #{tpu_custom_call.1} parent=1 // pred_check_branch
      %18 = sbr.rel (0) target = $region17
    $region16: #{tpu_custom_call.1} parent=1 // pred_region
      _
    $region17: #{tpu_custom_call.1} parent=1 // pred_fallthru
      _
    // Predicated region
    $region18: #{tpu_custom_call.1} parent=1 // pred_check
      _
    $region19: #{tpu_custom_call.1} parent=1 // pred_check_branch
      %20 = sbr.rel (0) target = $region21
    $region20: #{tpu_custom_call.1} parent=1 // pred_region
      _
    $region21: #{tpu_custom_call.1} parent=1 // pred_fallthru
      _
    %v21 = vld [vmem:[%s0] sm:$0xff]
    %v22 = vld [vmem:[%s1] sm:$0xff]
    %v23 = vld [vmem:[%s1 + $0x8] sm:$0xff]
    %v24 = vld [vmem:[%s1 + $0x10] sm:$0xff]
    %v25 = vld [vmem:[%s1 + $0x18] sm:$0xff]
    %v26 = vld [vmem:[%s2] sm:$0x1]
    %v28 = vperm.slane %v26, 0
    %vm30 = vcmask 261120
    %v32 = vsel %vm30, %v21, 0
    %34 = vmatpush.msra.mxu0 0.0
    %35 = vmatpush.msra.mxu0 0.0
    %36 = vmatpush.msra.mxu0 0.0
    %37 = vmatpush.msra.mxu0 0.0
    %38 = vmatpush.msra.mxu0 0.0
    %39 = vmatpush.msra.mxu0 0.0
    %40 = vmatpush.msra.mxu0 0.0
    %41 = vmatpush.msra.mxu0 0.0
    %42 = vmatpush.msra.mxu0 0.0
    %43 = vmatpush.msra.mxu0 0.0
    %44 = vmatpush.msra.mxu0 0.0
    %45 = vmatpush.msra.mxu0 0.0
    %46 = vmatpush.msra.mxu0 %v25
    %47 = vmatpush.msra.mxu0 %v24
    %48 = vmatpush.msra.mxu0 %v23
    %49 = vmatpush.msra.mxu0 %v22
    %50 = vmatmul.f32.gmra.mxu0 %v32
    %v51 = vpop.f32.mrf.mxu0
    %v52 = vadd.f32 %v28, %v51
    %53 = vdwg.mxu0
    %v54 = vmax.f32 %v52, 0.0
    %v55 = vld [vmem:[%s3] sm:$0xff]
    %v56 = vld [vmem:[%s3 + $0x8] sm:$0xff]
    %v57 = vld [vmem:[%s3 + $0x10] sm:$0xff]
    %v58 = vld [vmem:[%s3 + $0x18] sm:$0xff]
    %v59 = vld [vmem:[%s3 + $0x20] sm:$0xff]
    %v60 = vld [vmem:[%s3 + $0x28] sm:$0xff]
    %v61 = vld [vmem:[%s3 + $0x30] sm:$0xff]
    %v62 = vld [vmem:[%s3 + $0x38] sm:$0xff]
    %v63 = vld [vmem:[%s4] sm:$0x1]
    %v65 = vperm.slane %v63, 0
    %vm67 = vcmask 523264
    %v69 = vsel %vm67, %v54, 0
    %71 = vmatpush.msra.mxu0 0.0
    %72 = vmatpush.msra.mxu0 0.0
    %73 = vmatpush.msra.mxu0 0.0
    %74 = vmatpush.msra.mxu0 0.0
    %75 = vmatpush.msra.mxu0 0.0
    %76 = vmatpush.msra.mxu0 0.0
    %77 = vmatpush.msra.mxu0 0.0
    %78 = vmatpush.msra.mxu0 0.0
    %79 = vmatpush.msra.mxu0 %v62
    %80 = vmatpush.msra.mxu0 %v61
    %81 = vmatpush.msra.mxu0 %v60
    %82 = vmatpush.msra.mxu0 %v59
    %83 = vmatpush.msra.mxu0 %v58
    %84 = vmatpush.msra.mxu0 %v57
    %85 = vmatpush.msra.mxu0 %v56
    %86 = vmatpush.msra.mxu0 %v55
    %87 = vmatmul.f32.gmra.mxu0 %v69
    %v88 = vpop.f32.mrf.mxu0
    %v89 = vadd.f32 %v65, %v88
    %90 = vdwg.mxu0
    %vm91 = vcmask 130048
    %92 = vst.msk [vmem:[#allocation2] sm:$0xff] %vm91, %v89
    // Predicated region
    $region22: #{tpu_custom_call.1} parent=1 // pred_check
      _
    $region23: #{tpu_custom_call.1} parent=1 // pred_check_branch
      %94 = sbr.rel (0) target = $region25
    $region24: #{tpu_custom_call.1} parent=1 // pred_region
      %96 = vsyncadd [#allocation3], 0
      %s98 = sshll.u32 [#allocation2], 4
      %s99 = int_to_ptr.vmem [resolvable:$true] %s98
      %s100 = sshll.u32 %s5, 4
      %s101 = int_to_ptr.hbm [resolvable:$true] %s100
      %103 = dma.vmem_to_hbm [thread:$0]  %s99, 128, %s101, [#allocation3]
    $region25: #{tpu_custom_call.1} parent=1 // pred_fallthru
      _
    // Predicated region
    $region26: #{tpu_custom_call.1} parent=1 // pred_check
      _
    $region27: #{tpu_custom_call.1} parent=1 // pred_check_branch
      %105 = sbr.rel (0) target = $region29
    $region28: #{tpu_custom_call.1} parent=1 // pred_region
      %107 = dma.done [#allocation3], 128
    $region29: #{tpu_custom_call.1} parent=1 // pred_fallthru
      _
    %108 = vsyncpa [#allocation3], 1

// kernel: tpu_custom_call.1
$region0: #{tpu_custom_call.1}
  #allocation0 [shape = 'u32[]', space=smem, size = 0x4, offset = 0x4, fixed_abs, tag = 'smem constant byte address 0x4 - core index']
  #allocation1 [shape = 'u32[72,128]{1,0:T(1,128)}', space=vmem, size = 0x9000, scoped, tag = 'internal scratch']
  %s0 = inlined_call_operand.vmem [shape: f32[8,32], index: 0, kind: input, shape index: {}]
  %s1 = inlined_call_operand.vmem [shape: f32[32,64], index: 1, kind: input, shape index: {}]
  %s2 = inlined_call_operand.vmem [shape: f32[1,64], index: 2, kind: input, shape index: {}]
  %s3 = inlined_call_operand.vmem [shape: f32[64,16], index: 3, kind: input, shape index: {}]
  %s4 = inlined_call_operand.vmem [shape: f32[1,16], index: 4, kind: input, shape index: {}]
  %s5 = inlined_call_operand.hbm [shape: f32[8,16], index: 5, kind: output, shape index: {}]
  %s6 = sld [smem:[#allocation0]]
  $region30: #{tpu_custom_call.1} parent=0
    _
  %s8 = ssub.s32 1, %s6
  %s9 = scalar_select 0, %s8, %s6
  $region1: #{tpu_custom_call.1} parent=0
    #allocation2 [shape = 'u8[4096]{0}', space=vmem, size = 0x1000, scoped, tag = 'output window, operand 0, single buffered']
    #allocation3 [shape = 's32[1]{0}', space=sflag, size = 0x4, scoped, tag = 'scoped memory for tpu_custom_call.1']
    %10 = vsyncpa [#allocation3], 0
    // Predicated region
    $region2: #{tpu_custom_call.1} parent=1 // pred_check
      _
    $region3: #{tpu_custom_call.1} parent=1 // pred_check_branch
      %12 = sbr.rel (0) target = $region5
    $region4: #{tpu_custom_call.1} parent=1 // pred_region
      _
    $region5: #{tpu_custom_call.1} parent=1 // pred_fallthru
      _
    // Predicated region
    $region6: #{tpu_custom_call.1} parent=1 // pred_check
      _
    $region7: #{tpu_custom_call.1} parent=1 // pred_check_branch
      %14 = sbr.rel (0) target = $region9
    $region8: #{tpu_custom_call.1} parent=1 // pred_region
      _
    $region9: #{tpu_custom_call.1} parent=1 // pred_fallthru
      _
    // Predicated region
    $region10: #{tpu_custom_call.1} parent=1 // pred_check
      _
    $region11: #{tpu_custom_call.1} parent=1 // pred_check_branch
      %16 = sbr.rel (0) target = $region13
    $region12: #{tpu_custom_call.1} parent=1 // pred_region
      _
    $region13: #{tpu_custom_call.1} parent=1 // pred_fallthru
      _
    // Predicated region
    $region14: #{tpu_custom_call.1} parent=1 // pred_check
      _
    $region15: #{tpu_custom_call.1} parent=1 // pred_check_branch
      %18 = sbr.rel (0) target = $region17
    $region16: #{tpu_custom_call.1} parent=1 // pred_region
      _
    $region17: #{tpu_custom_call.1} parent=1 // pred_fallthru
      _
    // Predicated region
    $region18: #{tpu_custom_call.1} parent=1 // pred_check
      _
    $region19: #{tpu_custom_call.1} parent=1 // pred_check_branch
      %20 = sbr.rel (0) target = $region21
    $region20: #{tpu_custom_call.1} parent=1 // pred_region
      _
    $region21: #{tpu_custom_call.1} parent=1 // pred_fallthru
      _
    %v21 = vld [vmem:[%s0] sm:$0xff]
    %v22 = vld [vmem:[%s1] sm:$0xff]
    %v23 = vld [vmem:[%s1 + $0x8] sm:$0xff]
    %v24 = vld [vmem:[%s1 + $0x10] sm:$0xff]
    %v25 = vld [vmem:[%s1 + $0x18] sm:$0xff]
    %v26 = vld [vmem:[%s2] sm:$0x1]
    %v28 = vperm.slane %v26, 0
    %vm30 = vcmask 261120
    %v32 = vsel %vm30, %v21, 0
    %34 = vmatpush.msra.mxu0 0.0
    %35 = vmatpush.msra.mxu0 0.0
    %36 = vmatpush.msra.mxu0 0.0
    %37 = vmatpush.msra.mxu0 0.0
    %38 = vmatpush.msra.mxu0 0.0
    %39 = vmatpush.msra.mxu0 0.0
    %40 = vmatpush.msra.mxu0 0.0
    %41 = vmatpush.msra.mxu0 0.0
    %42 = vmatpush.msra.mxu0 0.0
    %43 = vmatpush.msra.mxu0 0.0
    %44 = vmatpush.msra.mxu0 0.0
    %45 = vmatpush.msra.mxu0 0.0
    %46 = vmatpush.msra.mxu0 %v25
    %47 = vmatpush.msra.mxu0 %v24
    %48 = vmatpush.msra.mxu0 %v23
    %49 = vmatpush.msra.mxu0 %v22
    %50 = vmatmul.f32.gmra.mxu0 %v32
    %v51 = vpop.f32.mrf.mxu0
    %v52 = vadd.f32 %v28, %v51
    %53 = vdwg.mxu0
    %v54 = vmax.f32 %v52, 0.0
    %v55 = vld [vmem:[%s3] sm:$0xff]
    %v56 = vld [vmem:[%s3 + $0x8] sm:$0xff]
    %v57 = vld [vmem:[%s3 + $0x10] sm:$0xff]
    %v58 = vld [vmem:[%s3 + $0x18] sm:$0xff]
    %v59 = vld [vmem:[%s3 + $0x20] sm:$0xff]
    %v60 = vld [vmem:[%s3 + $0x28] sm:$0xff]
    %v61 = vld [vmem:[%s3 + $0x30] sm:$0xff]
    %v62 = vld [vmem:[%s3 + $0x38] sm:$0xff]
    %v63 = vld [vmem:[%s4] sm:$0x1]
    %v65 = vperm.slane %v63, 0
    %vm67 = vcmask 523264
    %v69 = vsel %vm67, %v54, 0
    %71 = vmatpush.msra.mxu0 0.0
    %72 = vmatpush.msra.mxu0 0.0
    %73 = vmatpush.msra.mxu0 0.0
    %74 = vmatpush.msra.mxu0 0.0
    %75 = vmatpush.msra.mxu0 0.0
    %76 = vmatpush.msra.mxu0 0.0
    %77 = vmatpush.msra.mxu0 0.0
    %78 = vmatpush.msra.mxu0 0.0
    %79 = vmatpush.msra.mxu0 %v62
    %80 = vmatpush.msra.mxu0 %v61
    %81 = vmatpush.msra.mxu0 %v60
    %82 = vmatpush.msra.mxu0 %v59
    %83 = vmatpush.msra.mxu0 %v58
    %84 = vmatpush.msra.mxu0 %v57
    %85 = vmatpush.msra.mxu0 %v56
    %86 = vmatpush.msra.mxu0 %v55
    %87 = vmatmul.f32.gmra.mxu0 %v69
    %v88 = vpop.f32.mrf.mxu0
    %v89 = vadd.f32 %v65, %v88
    %90 = vdwg.mxu0
    %vm91 = vcmask 130048
    %92 = vst.msk [vmem:[#allocation2] sm:$0xff] %vm91, %v89
    // Predicated region
    $region22: #{tpu_custom_call.1} parent=1 // pred_check
      _
    $region23: #{tpu_custom_call.1} parent=1 // pred_check_branch
      %94 = sbr.rel (0) target = $region25
    $region24: #{tpu_custom_call.1} parent=1 // pred_region
      %96 = vsyncadd [#allocation3], 0
      %s98 = sshll.u32 [#allocation2], 4
      %s99 = int_to_ptr.vmem [resolvable:$true] %s98
      %s100 = sshll.u32 %s5, 4
      %s101 = int_to_ptr.hbm [resolvable:$true] %s100
      %103 = dma.vmem_to_hbm [thread:$0]  %s99, 128, %s101, [#allocation3]
    $region25: #{tpu_custom_call.1} parent=1 // pred_fallthru
      _
    // Predicated region
    $region26: #{tpu_custom_call.1} parent=1 // pred_check
      _
    $region27: #{tpu_custom_call.1} parent=1 // pred_check_branch
      %105 = sbr.rel (0) target = $region29
    $region28: #{tpu_custom_call.1} parent=1 // pred_region
      %107 = dma.done [#allocation3], 128
    $region29: #{tpu_custom_call.1} parent=1 // pred_fallthru
      _
    %108 = vsyncpa [#allocation3], 1

</llo_original>
